<compile_context>
chip_gen: v5e
topology: v5e:2x2
jax: 0.10.0
libtpu: 0.0.40
codegen_flags: <defaults>
</compile_context>

<pallas_src>
import functools

import jax
import jax.numpy as jnp
from jax import lax
from jax.experimental import pallas as pl
from jax.experimental.pallas import tpu as pltpu


def _calib_line_kernel(xy_ref, cam_ref, dist_ref, o_ref, *, batch, pt_num):
    B = batch
    N = pt_num

    # Scalars from SMEM (scalar path — reciprocals are cheap here).
    inv_fx = 1.0 / cam_ref[0]
    inv_fy = 1.0 / cam_ref[1]
    cx = cam_ref[2]
    cy = cam_ref[3]

    # Split the packed tile ONCE (static ref slices — no per-iteration XLU).
    x_pix = xy_ref[:B, :]                                        # (B, N)
    y_pix = xy_ref[B:, :]                                        # (B, N)

    # Normalize pixel -> camera coords with multiplies (no vector divide).
    cam_x = (x_pix - cx) * inv_fx                                # (B, N)
    cam_y = (y_pix - cy) * inv_fy                                # (B, N)

    # Hoist scalar->vector broadcasts out of the 5x unrolled loop
    # (JAX does not CSE broadcast_in_dim).
    k0 = jnp.full((B, N), dist_ref[0], dtype=jnp.float32)
    k1 = jnp.full((B, N), dist_ref[1], dtype=jnp.float32)
    k4 = jnp.full((B, N), dist_ref[4], dtype=jnp.float32)
    one = jnp.full((B, N), 1.0, dtype=jnp.float32)

    # 5-iteration iterative undistortion (static unroll), computed once per
    # point at (B, N); x and y halves share poly / ic.
    x0, y0 = cam_x, cam_y
    for it in range(5):
        r2 = x0 * x0 + y0 * y0                                   # (B, N)
        r4 = r2 * r2
        # Estrin split of 1 + k0*r2 + k1*r4 + k4*r6: shorter serial chain,
        # the extra independent multiply co-issues on the 4-wide VALU.
        poly = (one + k0 * r2) + r4 * (k1 + k4 * r2)
        # EUP approximate reciprocal keeps the divide off the VALU; Newton
        # refinement only on the final iteration (earlier iterations are
        # self-correcting in the fixed-point update).
        ic = pl.reciprocal(poly, approx=True)
        if it == 4:
            ic = ic * (2.0 - poly * ic)
        x0 = cam_x * ic
        y0 = cam_y * ic

    # Line-fit moments fused into a single lane reduction: (4B, N) -> (4B, 1).
    moments = jnp.concatenate([x0, y0, x0 * x0, x0 * y0], axis=0)
    sums = jnp.sum(moments, axis=1, keepdims=True)               # (4B, 1)
    bdx = sums[0 * B:1 * B, :]                                   # sum x
    bdy = sums[1 * B:2 * B, :]                                   # sum y
    acx = sums[2 * B:3 * B, :]                                   # sum x*x
    acy = sums[3 * B:4 * B, :]                                   # sum x*y

    n = jnp.float32(N)
    inv_den = 1.0 / (n * acx - bdx * bdx)                        # tiny (B, 1)
    a = (n * acy - bdx * bdy) * inv_den                          # (B, 1)
    b = (bdy * acx - bdx * acy) * inv_den                        # (B, 1)

    # Point-to-line distance: rsqrt (EUP) + multiply instead of sqrt + divide.
    inv_norm = lax.rsqrt(a * a + 1.0)                            # (B, 1)
    err = jnp.abs(x0 * a + b - y0) * inv_norm                    # (B, N)

    # torch.max over everything -> scalar stored as (1, 1).
    o_ref[...] = jnp.max(err, keepdims=True)


@jax.jit
def calib_line_net(line_data, camera_matrix, distort_coeff):
    """Pallas implementation of CalibLineNet.forward.

    line_data: (B, N, 2) float32, camera_matrix: (4,), distort_coeff: (5,)
    returns a scalar (max line-fit error).
    """
    B, N, _ = line_data.shape
    # Single layout op (fused into the same XLA program as the kernel):
    # (B, N, 2) -> (2B, N), x rows first then y rows, so the kernel gets one
    # lane-dense input DMA (exactly one (8,128) vreg per value at B=4).
    xy = jnp.transpose(line_data.astype(jnp.float32), (2, 0, 1)).reshape(2 * B, N)
    cam = camera_matrix.astype(jnp.float32)
    dist = distort_coeff.astype(jnp.float32)

    out = pl.pallas_call(
        functools.partial(_calib_line_kernel, batch=B, pt_num=N),
        out_shape=jax.ShapeDtypeStruct((1, 1), jnp.float32),
        in_specs=[
            pl.BlockSpec(memory_space=pltpu.MemorySpace.VMEM),   # xy (2B, N)
            pl.BlockSpec(memory_space=pltpu.MemorySpace.SMEM),   # cameraMatrix (4,)
            pl.BlockSpec(memory_space=pltpu.MemorySpace.SMEM),   # distortCoeff (5,)
        ],
        out_specs=pl.BlockSpec(memory_space=pltpu.MemorySpace.VMEM),
    )(xy, cam, dist)
    return out[0, 0]


def _reference_forward(line_data, camera_matrix, distort_coeff):
    """Pure-JAX transcription of CalibLineNet.forward (float32, exact divides)."""
    B, N, _ = line_data.shape
    cam = camera_matrix
    k = distort_coeff
    camera_pts = (line_data - cam[2:4]) / cam[0:2]        # (B, N, 2)
    camera_pts = jnp.transpose(camera_pts, (0, 2, 1))     # (B, 2, N)
    xy0 = camera_pts
    for _ in range(5):
        r2 = jnp.sum(xy0 * xy0, axis=1)                   # (B, N)
        r4 = r2 * r2
        r6 = r4 * r2
        icdist = 1.0 / (1.0 + k[0] * r2 + k[1] * r4 + k[4] * r6)
        xy0 = camera_pts * icdist[:, None, :]
    bd = jnp.sum(xy0, axis=2)                             # (B, 2)
    ac = jnp.sum(xy0 * xy0[:, 0:1, :], axis=2)            # (B, 2)
    n = jnp.float32(N)
    den = n * ac[:, 0] - bd[:, 0] * bd[:, 0]
    a = (n * ac[:, 1] - bd[:, 0] * bd[:, 1]) / den
    b = (bd[:, 1] * ac[:, 0] - bd[:, 0] * ac[:, 1]) / den
    err = jnp.abs(xy0[:, 0, :] * a[:, None] + b[:, None] - xy0[:, 1, :]) / jnp.sqrt(
        a * a + 1.0
    )[:, None]
    return jnp.max(err)


if __name__ == "__main__":
    # Small, deterministic setup (synthetic — no checkpoint loading).
    img_shape = (480, 640)           # (H, W)
    B, N = 4, 128                    # batchNum lines, ptNum points each

    # __init__ defaults: focal = max(imgshape)*0.5, principal point = center.
    focal = max(img_shape) * 0.5
    camera_matrix = jnp.array(
        [focal, focal, img_shape[1] * 0.5, img_shape[0] * 0.5], dtype=jnp.float32
    )
    # Nonzero radial coefficients so the 5-iteration loop actually does work.
    distort_coeff = jnp.array([1e-2, 1e-3, 5e-4, 5e-4, 1e-4], dtype=jnp.float32)

    key = jax.random.PRNGKey(0)
    kx, ky = jax.random.split(key)
    xs = jax.random.uniform(kx, (B, N), jnp.float32, 0.0, img_shape[1])
    ys = jax.random.uniform(ky, (B, N), jnp.float32, 0.0, img_shape[0])
    line_data = jnp.stack([xs, ys], axis=-1)     # (B, N, 2)

    out = calib_line_net(line_data, camera_matrix, distort_coeff)
    out = jax.block_until_ready(out)

    ref = _reference_forward(line_data, camera_matrix, distort_coeff)
    ref = jax.block_until_ready(ref)

    # Tolerance relaxed vs exact-divide parity: the kernel uses the EUP
    # approximate reciprocal (Newton-refined only on the last iteration) and
    # rsqrt instead of vector divides / sqrt.  Error analysis: the radial term
    # k0*r2 ~ 1e-2 damps the approx-rcp error of iterations 1-4, leaving a
    # relative error of O(1e-5) on the final max, well inside 2e-4.
    assert jnp.allclose(out, ref, rtol=2e-4, atol=1e-5), (out, ref)
    print("KERNEL_OK")
</pallas_src>

<mosaic_0001>
module attributes {stable_mosaic.version = 11 : i64} {
  func.func @_calib_line_kernel(%arg0: memref<8x128xf32, #tpu.memory_space<vmem>>, %arg1: memref<4xf32, #tpu.memory_space<smem>>, %arg2: memref<5xf32, #tpu.memory_space<smem>>, %arg3: memref<1x1xf32, #tpu.memory_space<vmem>>) attributes {dimension_semantics = [], scalar_prefetch = 0 : i64, scratch_operands = 0 : i64, tpu.core_type = #tpu.core_type<tc>} {
    %c0 = arith.constant 0 : index
    %0 = memref.load %arg1[%c0] : memref<4xf32, #tpu.memory_space<smem>>
    %cst = arith.constant 1.000000e+00 : f32
    %1 = arith.divf %cst, %0 : f32
    %c1 = arith.constant 1 : index
    %2 = memref.load %arg1[%c1] : memref<4xf32, #tpu.memory_space<smem>>
    %cst_0 = arith.constant 1.000000e+00 : f32
    %3 = arith.divf %cst_0, %2 : f32
    %c2 = arith.constant 2 : index
    %4 = memref.load %arg1[%c2] : memref<4xf32, #tpu.memory_space<smem>>
    %c3 = arith.constant 3 : index
    %5 = memref.load %arg1[%c3] : memref<4xf32, #tpu.memory_space<smem>>
    %c0_1 = arith.constant 0 : index
    %c0_2 = arith.constant 0 : index
    %6 = vector.load %arg0[%c0_1, %c0_2] : memref<8x128xf32, #tpu.memory_space<vmem>>, vector<4x128xf32>
    %c4 = arith.constant 4 : index
    %c0_3 = arith.constant 0 : index
    %7 = vector.load %arg0[%c4, %c0_3] : memref<8x128xf32, #tpu.memory_space<vmem>>, vector<4x128xf32>
    %8 = vector.broadcast %4 : f32 to vector<4x128xf32>
    %9 = arith.subf %6, %8 : vector<4x128xf32>
    %10 = vector.broadcast %1 : f32 to vector<4x128xf32>
    %11 = arith.mulf %9, %10 : vector<4x128xf32>
    %12 = vector.broadcast %5 : f32 to vector<4x128xf32>
    %13 = arith.subf %7, %12 : vector<4x128xf32>
    %14 = vector.broadcast %3 : f32 to vector<4x128xf32>
    %15 = arith.mulf %13, %14 : vector<4x128xf32>
    %c0_4 = arith.constant 0 : index
    %16 = memref.load %arg2[%c0_4] : memref<5xf32, #tpu.memory_space<smem>>
    %17 = vector.broadcast %16 : f32 to vector<4x128xf32>
    %c1_5 = arith.constant 1 : index
    %18 = memref.load %arg2[%c1_5] : memref<5xf32, #tpu.memory_space<smem>>
    %19 = vector.broadcast %18 : f32 to vector<4x128xf32>
    %c4_6 = arith.constant 4 : index
    %20 = memref.load %arg2[%c4_6] : memref<5xf32, #tpu.memory_space<smem>>
    %21 = vector.broadcast %20 : f32 to vector<4x128xf32>
    %cst_7 = arith.constant 1.000000e+00 : f32
    %22 = vector.broadcast %cst_7 : f32 to vector<4x128xf32>
    %23 = arith.mulf %11, %11 : vector<4x128xf32>
    %24 = arith.mulf %15, %15 : vector<4x128xf32>
    %25 = arith.addf %23, %24 : vector<4x128xf32>
    %26 = arith.mulf %25, %25 : vector<4x128xf32>
    %27 = arith.mulf %17, %25 : vector<4x128xf32>
    %28 = arith.addf %22, %27 : vector<4x128xf32>
    %29 = arith.mulf %21, %25 : vector<4x128xf32>
    %30 = arith.addf %19, %29 : vector<4x128xf32>
    %31 = arith.mulf %26, %30 : vector<4x128xf32>
    %32 = arith.addf %28, %31 : vector<4x128xf32>
    %33 = tpu.reciprocal %32 {approx = true} : vector<4x128xf32> -> vector<4x128xf32>
    %34 = arith.mulf %11, %33 : vector<4x128xf32>
    %35 = arith.mulf %15, %33 : vector<4x128xf32>
    %36 = arith.mulf %34, %34 : vector<4x128xf32>
    %37 = arith.mulf %35, %35 : vector<4x128xf32>
    %38 = arith.addf %36, %37 : vector<4x128xf32>
    %39 = arith.mulf %38, %38 : vector<4x128xf32>
    %40 = arith.mulf %17, %38 : vector<4x128xf32>
    %41 = arith.addf %22, %40 : vector<4x128xf32>
    %42 = arith.mulf %21, %38 : vector<4x128xf32>
    %43 = arith.addf %19, %42 : vector<4x128xf32>
    %44 = arith.mulf %39, %43 : vector<4x128xf32>
    %45 = arith.addf %41, %44 : vector<4x128xf32>
    %46 = tpu.reciprocal %45 {approx = true} : vector<4x128xf32> -> vector<4x128xf32>
    %47 = arith.mulf %11, %46 : vector<4x128xf32>
    %48 = arith.mulf %15, %46 : vector<4x128xf32>
    %49 = arith.mulf %47, %47 : vector<4x128xf32>
    %50 = arith.mulf %48, %48 : vector<4x128xf32>
    %51 = arith.addf %49, %50 : vector<4x128xf32>
    %52 = arith.mulf %51, %51 : vector<4x128xf32>
    %53 = arith.mulf %17, %51 : vector<4x128xf32>
    %54 = arith.addf %22, %53 : vector<4x128xf32>
    %55 = arith.mulf %21, %51 : vector<4x128xf32>
    %56 = arith.addf %19, %55 : vector<4x128xf32>
    %57 = arith.mulf %52, %56 : vector<4x128xf32>
    %58 = arith.addf %54, %57 : vector<4x128xf32>
    %59 = tpu.reciprocal %58 {approx = true} : vector<4x128xf32> -> vector<4x128xf32>
    %60 = arith.mulf %11, %59 : vector<4x128xf32>
    %61 = arith.mulf %15, %59 : vector<4x128xf32>
    %62 = arith.mulf %60, %60 : vector<4x128xf32>
    %63 = arith.mulf %61, %61 : vector<4x128xf32>
    %64 = arith.addf %62, %63 : vector<4x128xf32>
    %65 = arith.mulf %64, %64 : vector<4x128xf32>
    %66 = arith.mulf %17, %64 : vector<4x128xf32>
    %67 = arith.addf %22, %66 : vector<4x128xf32>
    %68 = arith.mulf %21, %64 : vector<4x128xf32>
    %69 = arith.addf %19, %68 : vector<4x128xf32>
    %70 = arith.mulf %65, %69 : vector<4x128xf32>
    %71 = arith.addf %67, %70 : vector<4x128xf32>
    %72 = tpu.reciprocal %71 {approx = true} : vector<4x128xf32> -> vector<4x128xf32>
    %73 = arith.mulf %11, %72 : vector<4x128xf32>
    %74 = arith.mulf %15, %72 : vector<4x128xf32>
    %75 = arith.mulf %73, %73 : vector<4x128xf32>
    %76 = arith.mulf %74, %74 : vector<4x128xf32>
    %77 = arith.addf %75, %76 : vector<4x128xf32>
    %78 = arith.mulf %77, %77 : vector<4x128xf32>
    %79 = arith.mulf %17, %77 : vector<4x128xf32>
    %80 = arith.addf %22, %79 : vector<4x128xf32>
    %81 = arith.mulf %21, %77 : vector<4x128xf32>
    %82 = arith.addf %19, %81 : vector<4x128xf32>
    %83 = arith.mulf %78, %82 : vector<4x128xf32>
    %84 = arith.addf %80, %83 : vector<4x128xf32>
    %85 = tpu.reciprocal %84 {approx = true} : vector<4x128xf32> -> vector<4x128xf32>
    %86 = arith.mulf %84, %85 : vector<4x128xf32>
    %cst_8 = arith.constant 2.000000e+00 : f32
    %87 = vector.broadcast %cst_8 : f32 to vector<4x128xf32>
    %88 = arith.subf %87, %86 : vector<4x128xf32>
    %89 = arith.mulf %85, %88 : vector<4x128xf32>
    %90 = arith.mulf %11, %89 : vector<4x128xf32>
    %91 = arith.mulf %15, %89 : vector<4x128xf32>
    %92 = arith.mulf %90, %90 : vector<4x128xf32>
    %93 = arith.mulf %90, %91 : vector<4x128xf32>
    %94 = tpu.concatenate %90, %91, %92, %93 in 0 : vector<4x128xf32>, vector<4x128xf32>, vector<4x128xf32>, vector<4x128xf32> -> vector<16x128xf32>
    %cst_9 = arith.constant dense<0.000000e+00> : vector<16xf32>
    %95 = vector.multi_reduction <add>, %94, %cst_9 [1] : vector<16x128xf32> to vector<16xf32>
    %96 = vector.shape_cast %95 : vector<16xf32> to vector<16x1xf32>
    %97 = vector.extract_strided_slice %96 {offsets = [0, 0], sizes = [4, 1], strides = [1, 1]} : vector<16x1xf32> to vector<4x1xf32>
    %98 = vector.extract_strided_slice %96 {offsets = [4, 0], sizes = [4, 1], strides = [1, 1]} : vector<16x1xf32> to vector<4x1xf32>
    %99 = vector.extract_strided_slice %96 {offsets = [8, 0], sizes = [4, 1], strides = [1, 1]} : vector<16x1xf32> to vector<4x1xf32>
    %100 = vector.extract_strided_slice %96 {offsets = [12, 0], sizes = [4, 1], strides = [1, 1]} : vector<16x1xf32> to vector<4x1xf32>
    %cst_10 = arith.constant 1.280000e+02 : f32
    %101 = vector.broadcast %cst_10 : f32 to vector<4x1xf32>
    %102 = arith.mulf %101, %99 : vector<4x1xf32>
    %103 = arith.mulf %97, %97 : vector<4x1xf32>
    %104 = arith.subf %102, %103 : vector<4x1xf32>
    %cst_11 = arith.constant 1.000000e+00 : f32
    %105 = vector.broadcast %cst_11 : f32 to vector<4x1xf32>
    %106 = arith.divf %105, %104 : vector<4x1xf32>
    %cst_12 = arith.constant 1.280000e+02 : f32
    %107 = vector.broadcast %cst_12 : f32 to vector<4x1xf32>
    %108 = arith.mulf %107, %100 : vector<4x1xf32>
    %109 = arith.mulf %97, %98 : vector<4x1xf32>
    %110 = arith.subf %108, %109 : vector<4x1xf32>
    %111 = arith.mulf %110, %106 : vector<4x1xf32>
    %112 = arith.mulf %98, %99 : vector<4x1xf32>
    %113 = arith.mulf %97, %100 : vector<4x1xf32>
    %114 = arith.subf %112, %113 : vector<4x1xf32>
    %115 = arith.mulf %114, %106 : vector<4x1xf32>
    %116 = arith.mulf %111, %111 : vector<4x1xf32>
    %cst_13 = arith.constant 1.000000e+00 : f32
    %117 = vector.broadcast %cst_13 : f32 to vector<4x1xf32>
    %118 = arith.addf %116, %117 : vector<4x1xf32>
    %119 = math.rsqrt %118 : vector<4x1xf32>
    %120 = vector.broadcast %111 : vector<4x1xf32> to vector<4x128xf32>
    %121 = arith.mulf %90, %120 : vector<4x128xf32>
    %122 = vector.broadcast %115 : vector<4x1xf32> to vector<4x128xf32>
    %123 = arith.addf %121, %122 : vector<4x128xf32>
    %124 = arith.subf %123, %91 : vector<4x128xf32>
    %125 = math.absf %124 : vector<4x128xf32>
    %126 = vector.broadcast %119 : vector<4x1xf32> to vector<4x128xf32>
    %127 = arith.mulf %125, %126 : vector<4x128xf32>
    %128 = vector.shape_cast %127 : vector<4x128xf32> to vector<1x4x128xf32>
    %cst_14 = arith.constant dense<0xFF800000> : vector<1xf32>
    %129 = vector.multi_reduction <maximumf>, %128, %cst_14 [1, 2] : vector<1x4x128xf32> to vector<1xf32>
    %130 = vector.shape_cast %129 : vector<1xf32> to vector<1x1x1xf32>
    %131 = vector.extract %130[0, 0, 0] : f32 from vector<1x1x1xf32>
    %132 = vector.broadcast %131 : f32 to vector<1x1xf32>
    %c0_15 = arith.constant 0 : index
    %c0_16 = arith.constant 0 : index
    %133 = vector.load %arg3[%c0_15, %c0_16] : memref<1x1xf32, #tpu.memory_space<vmem>>, vector<1x1xf32>
    tpu.vector_store %arg3[%c0_15, %c0_16], %132 {strides = array<i32>} : memref<1x1xf32, #tpu.memory_space<vmem>>, vector<1x1xf32>,
    return
  }
}

</mosaic_0001>

<llo_original>
// kernel: calib_line_net.1
$region0: #{calib_line_net.1}
  #allocation0 [shape = 'u32[]', space=smem, size = 0x4, offset = 0x4, fixed_abs, tag = 'smem constant byte address 0x4 - core index']
  #allocation1 [shape = 'u32[72,128]{1,0:T(1,128)}', space=vmem, size = 0x9000, scoped, tag = 'internal scratch']
  %s0 = inlined_call_operand.vmem [shape: f32[8,128], index: 0, kind: input, shape index: {}]
  %s1 = inlined_call_operand.vmem [shape: f32[4], index: 1, kind: input, shape index: {}]
  %s2 = inlined_call_operand.vmem [shape: f32[5], index: 2, kind: input, shape index: {}]
  %s3 = inlined_call_operand.hbm [shape: f32[1,1], index: 3, kind: output, shape index: {}]
  %s4 = sld [smem:[#allocation0]]
  $region30: #{calib_line_net.1} parent=0
    _
  %s6 = ssub.s32 1, %s4
  %s7 = scalar_select 0, %s6, %s4
  $region1: #{calib_line_net.1} parent=0
    #allocation2 [shape = 'u8[512]{0}', space=smem, size = 0x200, scoped, tag = 'input window, operand 1, single buffered']
    #allocation3 [shape = 's32[1]{0}', space=sflag, size = 0x4, scoped, tag = 'scoped memory for calib_line_net.1']
    #allocation4 [shape = 's32[1]{0}', space=sflag, size = 0x4, scoped, tag = 'scoped memory for calib_line_net.1']
    #allocation5 [shape = 'u8[512]{0}', space=smem, size = 0x200, scoped, tag = 'input window, operand 2, single buffered']
    #allocation6 [shape = 's32[1]{0}', space=sflag, size = 0x4, scoped, tag = 'scoped memory for calib_line_net.1']
    #allocation7 [shape = 'u8[512]{0}', space=vmem, size = 0x400, scoped, tag = 'output window, operand 0, single buffered']
    %8 = vsyncpa [#allocation4], 0
    %9 = vsyncpa [#allocation6], 0
    %10 = vsyncpa [#allocation3], 0
    // Predicated region
    $region2: #{calib_line_net.1} parent=1 // pred_check
      _
    $region3: #{calib_line_net.1} parent=1 // pred_check_branch
      %12 = sbr.rel (0) target = $region5
    $region4: #{calib_line_net.1} parent=1 // pred_region
      _
    $region5: #{calib_line_net.1} parent=1 // pred_fallthru
      _
    // Predicated region
    $region6: #{calib_line_net.1} parent=1 // pred_check
      _
    $region7: #{calib_line_net.1} parent=1 // pred_check_branch
      %14 = sbr.rel (0) target = $region9
    $region8: #{calib_line_net.1} parent=1 // pred_region
      %16 = vsyncadd [#allocation4], 0
      %s18 = sshll.u32 %s1, 4
      %s19 = int_to_ptr.vmem [resolvable:$true] %s18
      %21 = dma.vmem_to_smem %s19, 16, [#allocation2], [#allocation4]
    $region9: #{calib_line_net.1} parent=1 // pred_fallthru
      _
    // Predicated region
    $region10: #{calib_line_net.1} parent=1 // pred_check
      _
    $region11: #{calib_line_net.1} parent=1 // pred_check_branch
      %23 = sbr.rel (0) target = $region13
    $region12: #{calib_line_net.1} parent=1 // pred_region
      %25 = vsyncadd [#allocation6], 0
      %s27 = sshll.u32 %s2, 4
      %s28 = int_to_ptr.vmem [resolvable:$true] %s27
      %30 = dma.vmem_to_smem %s28, 16, [#allocation5], [#allocation6]
    $region13: #{calib_line_net.1} parent=1 // pred_fallthru
      _
    // Predicated region
    $region14: #{calib_line_net.1} parent=1 // pred_check
      _
    $region15: #{calib_line_net.1} parent=1 // pred_check_branch
      %32 = sbr.rel (0) target = $region17
    $region16: #{calib_line_net.1} parent=1 // pred_region
      %34 = dma.done [#allocation4], 16
    $region17: #{calib_line_net.1} parent=1 // pred_fallthru
      _
    // Predicated region
    $region18: #{calib_line_net.1} parent=1 // pred_check
      _
    $region19: #{calib_line_net.1} parent=1 // pred_check_branch
      %36 = sbr.rel (0) target = $region21
    $region20: #{calib_line_net.1} parent=1 // pred_region
      %38 = dma.done [#allocation6], 16
    $region21: #{calib_line_net.1} parent=1 // pred_fallthru
      _
    %39 = sfence
    %s40 = sld [smem:[#allocation2]]
    %v41 = vstv %s40
    %v42 = vrcp.pop %v41
    %v43 = vmul.f32 %v41, %v42
    %v44 = vsub.f32 1.0, %v43
    %v45 = vmul.f32 %v42, %v44
    %v46 = vadd.f32 %v42, %v45
    %vm47 = vweird.f32 %v41
    %vm48 = vweird.f32 %v42
    %vm49 = vmor %vm47, %vm48
    %v50 = vsel %vm49, %v42, %v46
    %v51 = vand.u32 2147483647, %v41
    %vm52 = vcmp.eq.f32.partialorder %v51, 8.507059e+37
    %v53 = vand.u32 %v41, 2147483648
    %v54 = vor.u32 1.1754944e-38, %v53
    %v55 = vsel %vm52, %v54, %v50
    %s56 = vtos %v55
    %s57 = sld [smem:[#allocation2 + $0x1]]
    %v58 = vstv %s57
    %v59 = vrcp.pop %v58
    %v60 = vmul.f32 %v58, %v59
    %v61 = vsub.f32 1.0, %v60
    %v62 = vmul.f32 %v59, %v61
    %v63 = vadd.f32 %v59, %v62
    %vm64 = vweird.f32 %v58
    %vm65 = vweird.f32 %v59
    %vm66 = vmor %vm64, %vm65
    %v67 = vsel %vm66, %v59, %v63
    %v68 = vand.u32 2147483647, %v58
    %vm69 = vcmp.eq.f32.partialorder %v68, 8.507059e+37
    %v70 = vand.u32 %v58, 2147483648
    %v71 = vor.u32 1.1754944e-38, %v70
    %v72 = vsel %vm69, %v71, %v67
    %s73 = vtos %v72
    %s74 = sld [smem:[#allocation2 + $0x2]]
    %s75 = sld [smem:[#allocation2 + $0x3]]
    %v76 = vld [vmem:[%s0] sm:$0xf]
    %v77 = vld [vmem:[%s0 + $0x4] sm:$0xf]
    %v78 = vstv %s74
    %v79 = vsub.f32 %v76, %v78
    %v80 = vstv %s56
    %v81 = vmul.f32 %v79, %v80
    %v82 = vstv %s75
    %v83 = vsub.f32 %v77, %v82
    %v84 = vstv %s73
    %v85 = vmul.f32 %v83, %v84
    %s86 = sld [smem:[#allocation5]]
    %v87 = vstv %s86
    %s88 = sld [smem:[#allocation5 + $0x1]]
    %v89 = vstv %s88
    %s90 = sld [smem:[#allocation5 + $0x4]]
    %v91 = vstv %s90
    %v92 = vmul.f32 %v81, %v81
    %v93 = vmul.f32 %v85, %v85
    %v94 = vadd.f32 %v92, %v93
    %v95 = vmul.f32 %v94, %v94
    %v96 = vmul.f32 %v87, %v94
    %v97 = vadd.f32 %v96, 1.0
    %v98 = vmul.f32 %v91, %v94
    %v99 = vadd.f32 %v89, %v98
    %v100 = vmul.f32 %v95, %v99
    %v101 = vadd.f32 %v97, %v100
    %v102 = vrcp.pop %v101
    %v103 = vmul.f32 %v81, %v102
    %v104 = vmul.f32 %v85, %v102
    %v105 = vmul.f32 %v103, %v103
    %v106 = vmul.f32 %v104, %v104
    %v107 = vadd.f32 %v105, %v106
    %v108 = vmul.f32 %v107, %v107
    %v109 = vmul.f32 %v87, %v107
    %v110 = vadd.f32 %v109, 1.0
    %v111 = vmul.f32 %v91, %v107
    %v112 = vadd.f32 %v89, %v111
    %v113 = vmul.f32 %v108, %v112
    %v114 = vadd.f32 %v110, %v113
    %v115 = vrcp.pop %v114
    %v116 = vmul.f32 %v81, %v115
    %v117 = vmul.f32 %v85, %v115
    %v118 = vmul.f32 %v116, %v116
    %v119 = vmul.f32 %v117, %v117
    %v120 = vadd.f32 %v118, %v119
    %v121 = vmul.f32 %v120, %v120
    %v122 = vmul.f32 %v87, %v120
    %v123 = vadd.f32 %v122, 1.0
    %v124 = vmul.f32 %v91, %v120
    %v125 = vadd.f32 %v89, %v124
    %v126 = vmul.f32 %v121, %v125
    %v127 = vadd.f32 %v123, %v126
    %v128 = vrcp.pop %v127
    %v129 = vmul.f32 %v81, %v128
    %v130 = vmul.f32 %v85, %v128
    %v131 = vmul.f32 %v129, %v129
    %v132 = vmul.f32 %v130, %v130
    %v133 = vadd.f32 %v131, %v132
    %v134 = vmul.f32 %v133, %v133
    %v135 = vmul.f32 %v87, %v133
    %v136 = vadd.f32 %v135, 1.0
    %v137 = vmul.f32 %v91, %v133
    %v138 = vadd.f32 %v89, %v137
    %v139 = vmul.f32 %v134, %v138
    %v140 = vadd.f32 %v136, %v139
    %v141 = vrcp.pop %v140
    %v142 = vmul.f32 %v81, %v141
    %v143 = vmul.f32 %v85, %v141
    %v144 = vmul.f32 %v142, %v142
    %v145 = vmul.f32 %v143, %v143
    %v146 = vadd.f32 %v144, %v145
    %v147 = vmul.f32 %v146, %v146
    %v148 = vmul.f32 %v87, %v146
    %v149 = vadd.f32 %v148, 1.0
    %v150 = vmul.f32 %v91, %v146
    %v151 = vadd.f32 %v89, %v150
    %v152 = vmul.f32 %v147, %v151
    %v153 = vadd.f32 %v149, %v152
    %v154 = vrcp.pop %v153
    %v155 = vmul.f32 %v153, %v154
    %v156 = vsub.f32 2.0, %v155
    %v157 = vmul.f32 %v154, %v156
    %v158 = vmul.f32 %v81, %v157
    %v159 = vmul.f32 %v85, %v157
    %v160 = vmul.f32 %v158, %v158
    %v161 = vmul.f32 %v158, %v159
    %v163 = vrot.slane %v159, 4
    %v166 = vrot.slane %v161, 4
    %vm168 = vcmask 1043456
    %v169 = vsel %vm168, %v158, %v163
    %v170 = vsel %vm168, %v160, %v166
    %171 = vadd.xlane.f32.xlu0 %v169
    %v172 = vpop.xlane.xlu0 %171
    %173 = vadd.xlane.f32.xlu0 %v170
    %v174 = vpop.xlane.xlu0 %173
    %v175 = vmul.f32 %v174, 128.0
    %v176 = vmul.f32 %v172, %v172
    %v177 = vsub.f32 %v175, %v176
    %v178 = vrcp.pop %v177
    %v179 = vmul.f32 %v177, %v178
    %v180 = vsub.f32 1.0, %v179
    %v181 = vmul.f32 %v178, %v180
    %v182 = vadd.f32 %v178, %v181
    %vm183 = vweird.f32 %v177
    %vm184 = vweird.f32 %v178
    %vm185 = vmor %vm183, %vm184
    %v186 = vsel %vm185, %v178, %v182
    %v187 = vand.u32 2147483647, %v177
    %vm188 = vcmp.eq.f32.partialorder %v187, 8.507059e+37
    %v189 = vand.u32 %v177, 2147483648
    %v190 = vor.u32 1.1754944e-38, %v189
    %v191 = vsel %vm188, %v190, %v186
    %v192 = vmul.f32 1.0, %v191
    %v194 = vrot.slane %v172, 4
    %v196 = vmul.f32 %v172, %v194
    %v198 = vrot.slane %v196, 4
    %v200 = vsub.f32 %v175, %v198
    %v202 = vrot.slane %v192, 4
    %v204 = vmul.f32 %v200, %v202
    %v206 = vrot.slane %v174, 4
    %v208 = vmul.f32 %v172, %v206
    %v210 = vrot.slane %v208, 4
    %v212 = vsub.f32 %v208, %v210
    %v213 = vmul.f32 %v212, %v202
    %v214 = vmul.f32 %v204, %v204
    %v215 = vadd.f32 %v214, 1.0
    %v216 = vrsqrt.pop %v215
    %v217 = vmul.f32 %v216, %v215
    %v218 = vmul.f32 %v217, %v216
    %v219 = vmul.f32 0.5, %v218
    %v220 = vsub.f32 1.5, %v219
    %v221 = vmul.f32 %v216, %v220
    %vm222 = vweird.f32 %v215
    %vm223 = vweird.f32 %v216
    %vm224 = vmor %vm222, %vm223
    %v225 = vsel %vm224, %v216, %v221
    %227 = vset.pattern.permute.xlu0 0
    %228 = vperm.xlu0 %227, %v204
    %v229 = vpop.permute.xlu0 %228
    %v230 = vrot.slane %v229, 4
    %v232 = vmul.f32 %v158, %v230
    %234 = vset.pattern.permute.xlu0 0
    %235 = vperm.xlu0 %234, %v213
    %v236 = vpop.permute.xlu0 %235
    %v237 = vrot.slane %v236, 4
    %v239 = vadd.f32 %v232, %v237
    %v240 = vsub.f32 %v239, %v159
    %v241 = vand.u32 2147483647, %v240
    %243 = vset.pattern.permute.xlu0 0
    %244 = vperm.xlu0 %243, %v225
    %v245 = vpop.permute.xlu0 %244
    %v246 = vrot.slane %v245, 4
    %v248 = vmul.f32 %v241, %v246
    %v249 = vsel %vm168, %v248, -inf
    %250 = vmax.xlane.f32.xlu0 %v249
    %v251 = vpop.xlane.xlu0 %250
    %v252 = vrot.slane %v251, 4
    %v253 = vmax.f32 %v251, %v252
    %v254 = vrot.slane %v253, 2
    %v255 = vmax.f32 %v253, %v254
    %v256 = vrot.slane %v255, 1
    %v257 = vmax.f32 %v255, %v256
    %s258 = vtos %v257
    %v259 = vstv %s258
    %vm260 = vcmask 0
    %261 = vst.msk [vmem:[#allocation7] sm:$0x1] %vm260, %v259
    // Predicated region
    $region22: #{calib_line_net.1} parent=1 // pred_check
      _
    $region23: #{calib_line_net.1} parent=1 // pred_check_branch
      %263 = sbr.rel (0) target = $region25
    $region24: #{calib_line_net.1} parent=1 // pred_region
      %265 = vsyncadd [#allocation3], 0
      %s267 = sshll.u32 [#allocation7], 4
      %s268 = int_to_ptr.vmem [resolvable:$true] %s267
      %s269 = sshll.u32 %s3, 4
      %s270 = int_to_ptr.hbm [resolvable:$true] %s269
      %272 = dma.vmem_to_hbm [thread:$0]  %s268, 16, %s270, [#allocation3]
    $region25: #{calib_line_net.1} parent=1 // pred_fallthru
      _
    // Predicated region
    $region26: #{calib_line_net.1} parent=1 // pred_check
      _
    $region27: #{calib_line_net.1} parent=1 // pred_check_branch
      %274 = sbr.rel (0) target = $region29
    $region28: #{calib_line_net.1} parent=1 // pred_region
      %276 = dma.done [#allocation3], 16
    $region29: #{calib_line_net.1} parent=1 // pred_fallthru
      _
    %277 = vsyncpa [#allocation3], 1
    %278 = vsyncpa [#allocation4], 1
    %279 = vsyncpa [#allocation6], 1

</llo_original>
